<compile_context>
chip_gen: v7x
topology: tpu7x:2x2x1
jax: 0.10.0
libtpu: 0.0.40
codegen_flags: <defaults>
</compile_context>

<pallas_src>
import jax
import jax.numpy as jnp
from jax.experimental import pallas as pl
from jax.experimental.pallas import tpu as pltpu


# ----------------------------------------------------------------------------------------
# Kernel body: one FFN tile of the expert MLP for one core-split half.
# ----------------------------------------------------------------------------------------
def _expert_kernel(x_ref, w13_ref, w2_ref, rw_ref, out_ref, acc_ref):
    """x_ref   : (bp, H)       bf16 gathered tokens (resident, same block every step)
       w13_ref : (2, H, TF)    bf16 stacked [W1.T, W3.T] contiguous tile
       w2_ref  : (TF, H)       bf16 W2.T contiguous tile
       rw_ref  : (bp, 1)       f32 per-token routing weight (resident)
       out_ref : (bp, H)       f32 partial output for this core-split (written last step)
       acc_ref : (bp, H)       f32 accumulator scratch
    """
    f = pl.program_id(1)

    @pl.when(f == 0)
    def _():
        acc_ref[...] = jnp.zeros_like(acc_ref)

    x = x_ref[...]
    g = jnp.dot(x, w13_ref[0], preferred_element_type=jnp.float32)     # gate proj (f32 acc)
    u = jnp.dot(x, w13_ref[1], preferred_element_type=jnp.float32)     # up proj   (f32 acc)
    h = (g * jax.nn.sigmoid(g)) * u                                     # SiLU gate, f32
    acc_ref[...] += jnp.dot(h.astype(w2_ref.dtype), w2_ref[...],
                            preferred_element_type=jnp.float32)         # down proj

    @pl.when(f == pl.num_programs(1) - 1)
    def _():
        out_ref[...] = acc_ref[...] * rw_ref[...]                       # per-row routing scale


# ----------------------------------------------------------------------------------------
# Load-time weight preparation (NOT per call).
# ----------------------------------------------------------------------------------------
def _vmem_capacity_bytes():
    try:
        return int(pltpu.get_tpu_info().vmem_capacity_bytes)
    except Exception:
        return 64 * 1024 * 1024        # conservative: v7x per-TensorCore VMEM


def _pick_ffn_tile(hidden_dim, ffn_dim, weight_itemsize, vmem_cap, bp_hint=128):
    """Largest FFN tile (dividing ffn_dim, multiple of 128) whose double-buffered weight
    tiles + matmul intermediates fit next to the resident token / accumulator buffers."""
    if ffn_dim % 128 != 0:
        return ffn_dim                                   # tiny / odd shapes: single tile
    resident = (2 * bp_hint * hidden_dim * weight_itemsize   # x (double-buffered)
                + bp_hint * hidden_dim * 4                    # f32 accumulator
                + 2 * bp_hint * hidden_dim * 4                # f32 partial out (double-buffered)
                + 4 * bp_hint * 4)                            # routing weights
    budget = int(vmem_cap * 0.75) - resident
    for tf in (3584, 2048, 1792, 1024, 896, 512, 448, 256, 128):
        if ffn_dim % tf != 0:
            continue
        weights = 2 * 3 * hidden_dim * tf * weight_itemsize   # 2 bufs x (W1t + W3t + W2t) cols
        inter = bp_hint * tf * (3 * 4 + weight_itemsize)      # g, u, h (f32) + h bf16 cast
        if weights + inter <= budget:
            return tf
    return 128


def prepare_expert_weights(w1, w2, w3, compute_dtype=jnp.bfloat16, ffn_tile=None):
    """Transpose + cast + lay out the expert weights as contiguous per-FFN-tile slabs.

    w1, w3 : (ffn_dim, hidden_dim)    w2 : (hidden_dim, ffn_dim)
    returns  w13_tiles (n_f, 2, H, TF),  w2_tiles (n_f, TF, H)
    """
    ffn_dim, hidden_dim = w1.shape
    if ffn_tile is None:
        ffn_tile = _pick_ffn_tile(hidden_dim, ffn_dim,
                                  jnp.dtype(compute_dtype).itemsize,
                                  _vmem_capacity_bytes())
    assert ffn_dim % ffn_tile == 0, (ffn_dim, ffn_tile)
    n_f = ffn_dim // ffn_tile

    w13 = jnp.stack([jnp.transpose(w1), jnp.transpose(w3)], axis=0).astype(compute_dtype)
    w13_tiles = jnp.transpose(w13.reshape(2, hidden_dim, n_f, ffn_tile), (2, 0, 1, 3))
    w2_tiles = jnp.transpose(w2).astype(compute_dtype).reshape(n_f, ffn_tile, hidden_dim)
    return w13_tiles, w2_tiles


# ----------------------------------------------------------------------------------------
# Forward wrapper (JAX/Pallas equivalent of SSMixtralBLockSparseTop2MLP.forward).
# ----------------------------------------------------------------------------------------
@jax.jit
def ss_mixtral_block_sparse_top2_mlp(hidden_states, input_idx, routing_weights,
                                     w13_tiles, w2_tiles):
    """hidden_states  : (num_tokens, hidden_dim)
       input_idx      : (batch_size,) int32 — tokens routed to this expert
       routing_weights: (batch_size, 1)     — per-token routing weight
       w13_tiles      : (n_f, 2, H, TF)  from prepare_expert_weights
       w2_tiles       : (n_f, TF, H)     from prepare_expert_weights
       returns        : (batch_size, hidden_dim) in hidden_states.dtype
    """
    batch_size = input_idx.shape[0]
    n_f, _, hidden_dim, ffn_tile = w13_tiles.shape
    ffn_dim = n_f * ffn_tile
    compute_dtype = w13_tiles.dtype
    cbytes = jnp.dtype(compute_dtype).itemsize

    # Pad the routed batch to a multiple of 16 rows (bf16 sublane packing), min 128 rows
    # so each streamed weight tile is amortized over a full MXU M tile.  Padded rows are
    # zero -> zero outputs, sliced off below.
    bp = max(128, ((batch_size + 15) // 16) * 16)

    x = jnp.take(hidden_states, input_idx, axis=0).astype(compute_dtype)
    x = jnp.pad(x, ((0, bp - batch_size), (0, 0)))
    # routing_weights.T then reshape back to (B, 1) is value-preserving (matches the module).
    rw = jnp.reshape(jnp.transpose(routing_weights), (batch_size, 1)).astype(jnp.float32)
    rw = jnp.pad(rw, ((0, bp - batch_size), (0, 0)))

    # Split the weight stream across TensorCores (v7x megacore): each half of the leading
    # "parallel" axis reduces a disjoint half of the FFN columns into its own accumulator.
    n_split = 2 if (n_f >= 2 and n_f % 2 == 0) else 1
    n_steps = n_f // n_split

    # VMEM budget: double-buffered weight tiles + matmul intermediates + resident buffers.
    cap = _vmem_capacity_bytes()
    need = (2 * 3 * hidden_dim * ffn_tile * cbytes     # double-buffered weight tiles
            + bp * ffn_tile * (3 * 4 + cbytes)         # g, u, h (f32) + h bf16 cast
            + 2 * bp * hidden_dim * cbytes             # x (double-buffered)
            + 2 * bp * hidden_dim * 4                  # f32 partial out (double-buffered)
            + bp * hidden_dim * 4                      # f32 accumulator
            + 4 * bp * 4)                              # routing weights
    vmem_limit = int(min(max(need * 1.2, 32 * 1024 * 1024), cap - (4 << 20)))

    cost = pl.CostEstimate(
        flops=6 * bp * hidden_dim * ffn_dim,
        transcendentals=bp * ffn_dim,
        bytes_accessed=(3 * hidden_dim * ffn_dim * cbytes
                        + bp * hidden_dim * (cbytes + n_split * 4) + bp * 4),
    )

    grid_spec = pltpu.PrefetchScalarGridSpec(
        num_scalar_prefetch=0,
        grid=(n_split, n_steps),
        in_specs=[
            pl.BlockSpec((bp, hidden_dim), lambda c, f: (0, 0)),              # x (resident)
            pl.BlockSpec((None, 2, hidden_dim, ffn_tile),                     # [W1.T, W3.T] tile
                         lambda c, f: (c * n_steps + f, 0, 0, 0)),
            pl.BlockSpec((None, ffn_tile, hidden_dim),                        # W2.T tile
                         lambda c, f: (c * n_steps + f, 0, 0)),
            pl.BlockSpec((bp, 1), lambda c, f: (0, 0)),                       # routing weights
        ],
        out_specs=pl.BlockSpec((None, bp, hidden_dim), lambda c, f: (c, 0, 0)),
        scratch_shapes=[pltpu.VMEM((bp, hidden_dim), jnp.float32)],
    )

    partials = pl.pallas_call(
        _expert_kernel,
        out_shape=jax.ShapeDtypeStruct((n_split, bp, hidden_dim), jnp.float32),
        grid_spec=grid_spec,
        compiler_params=pltpu.CompilerParams(
            dimension_semantics=("parallel", "arbitrary"),
            vmem_limit_bytes=vmem_limit,
        ),
        cost_estimate=cost,
    )(x, w13_tiles, w2_tiles, rw)

    out = jnp.sum(partials, axis=0)          # combine per-core partial reductions (cheap)
    return out[0:batch_size, :].astype(hidden_states.dtype)


# ----------------------------------------------------------------------------------------
# Plain-JAX reference with the same dtype policy (bf16 inputs/weights, f32 accumulation).
# ----------------------------------------------------------------------------------------
def _reference(hidden_states, input_idx, routing_weights, w1, w2, w3,
               compute_dtype=jnp.bfloat16):
    x = hidden_states[input_idx].astype(compute_dtype)
    g = jnp.dot(x, w1.T.astype(compute_dtype), preferred_element_type=jnp.float32)
    g = g * jax.nn.sigmoid(g)
    u = jnp.dot(x, w3.T.astype(compute_dtype), preferred_element_type=jnp.float32)
    h = (g * u).astype(compute_dtype)
    o = jnp.dot(h, w2.T.astype(compute_dtype), preferred_element_type=jnp.float32)
    return (o * routing_weights.astype(jnp.float32)).astype(hidden_states.dtype)


if __name__ == "__main__":
    num_tokens = 16
    hidden_dim = 128
    ffn_dim = 512
    batch_size = 6       # tokens routed to this expert (exercises the [0:B] slice + padding)

    key = jax.random.PRNGKey(0)
    k_hs, k_w1, k_w2, k_w3, k_idx, k_rw = jax.random.split(key, 6)

    hidden_states = jax.random.normal(k_hs, (num_tokens, hidden_dim), dtype=jnp.float32)
    w1 = jax.random.uniform(k_w1, (ffn_dim, hidden_dim), jnp.float32, -0.1, 0.1)
    w2 = jax.random.uniform(k_w2, (hidden_dim, ffn_dim), jnp.float32, -0.1, 0.1)
    w3 = jax.random.uniform(k_w3, (ffn_dim, hidden_dim), jnp.float32, -0.1, 0.1)

    input_idx = jax.random.permutation(k_idx, num_tokens)[:batch_size].astype(jnp.int32)
    routing_weights = jax.random.uniform(k_rw, (batch_size, 1), jnp.float32, 0.0, 1.0)

    # One-time weight prep (transpose + bf16 cast + contiguous per-tile layout).
    # ffn_tile=128 -> 4 FFN tiles -> exercises the 2-way core split AND the 2-step reduction.
    w13_tiles, w2_tiles = prepare_expert_weights(w1, w2, w3, ffn_tile=128)

    out = ss_mixtral_block_sparse_top2_mlp(hidden_states, input_idx, routing_weights,
                                           w13_tiles, w2_tiles)
    out = jax.block_until_ready(out)

    ref = _reference(hidden_states, input_idx, routing_weights, w1, w2, w3)
    assert out.shape == (batch_size, hidden_dim), out.shape
    err = float(jnp.max(jnp.abs(out - ref)))
    assert jnp.allclose(out, ref, atol=5e-3, rtol=5e-3), ("mismatch vs reference", err)
    print("KERNEL_OK")
</pallas_src>

<mosaic_0001>
module attributes {stable_mosaic.version = 11 : i64} {
  func.func @_expert_kernel(%arg0: i32, %arg1: i32, %arg2: memref<128x128xbf16, #tpu.memory_space<vmem>>, %arg3: memref<1x2x128x128xbf16, #tpu.memory_space<vmem>>, %arg4: memref<1x128x128xbf16, #tpu.memory_space<vmem>>, %arg5: memref<128x1xf32, #tpu.memory_space<vmem>>, %arg6: memref<1x128x128xf32, #tpu.memory_space<vmem>>, %arg7: memref<128x128xf32, #tpu.memory_space<vmem>>) attributes {dimension_semantics = [#tpu.dimension_semantics<parallel>, #tpu.dimension_semantics<arbitrary>], iteration_bounds = array<i64: 2, 2>, scalar_prefetch = 0 : i64, scratch_operands = 1 : i64, tpu.core_type = #tpu.core_type<tc>, window_params = [{pipeline_mode = #tpu.pipeline_mode<synchronous>, transform_indices = @transform_0, window_bounds = array<i64: 128, 128>}, {transform_indices = @transform_1, window_bounds = array<i64: 1, 2, 128, 128>}, {transform_indices = @transform_2, window_bounds = array<i64: 1, 128, 128>}, {pipeline_mode = #tpu.pipeline_mode<synchronous>, transform_indices = @transform_3, window_bounds = array<i64: 128, 1>}, {transform_indices = @transform_4, window_bounds = array<i64: 1, 128, 128>}]} {
    %c0_i32 = arith.constant 0 : i32
    %0 = arith.cmpi eq, %arg1, %c0_i32 : i32
    %1 = arith.extui %0 : i1 to i32
    %c0_i32_0 = arith.constant 0 : i32
    %2 = arith.cmpi ne, %1, %c0_i32_0 : i32
    scf.if %2 {
      %cst_20 = arith.constant 0.000000e+00 : f32
      %27 = vector.broadcast %cst_20 : f32 to vector<128x128xf32>
      %c0_21 = arith.constant 0 : index
      %c0_22 = arith.constant 0 : index
      %28 = vector.load %arg7[%c0_21, %c0_22] : memref<128x128xf32, #tpu.memory_space<vmem>>, vector<128x128xf32>
      tpu.vector_store %arg7[%c0_21, %c0_22], %27 {strides = array<i32>} : memref<128x128xf32, #tpu.memory_space<vmem>>, vector<128x128xf32>,
    } else {
    }
    %c0 = arith.constant 0 : index
    %c0_1 = arith.constant 0 : index
    %3 = vector.load %arg2[%c0, %c0_1] : memref<128x128xbf16, #tpu.memory_space<vmem>>, vector<128x128xbf16>
    %c0_2 = arith.constant 0 : index
    %c0_3 = arith.constant 0 : index
    %c0_4 = arith.constant 0 : index
    %c0_5 = arith.constant 0 : index
    %4 = vector.load %arg3[%c0_2, %c0_3, %c0_4, %c0_5] : memref<1x2x128x128xbf16, #tpu.memory_space<vmem>>, vector<1x1x128x128xbf16>
    %5 = vector.shape_cast %4 : vector<1x1x128x128xbf16> to vector<128x128xbf16>
    %cst = arith.constant dense<0.000000e+00> : vector<128x128xf32>
    %6 = tpu.matmul %3, %5, %cst {dimension_numbers = #tpu.dot_dimension_numbers<[1], [0], [0], [1], [0, 0, 1, 1], [], []>} : vector<128x128xbf16>, vector<128x128xbf16>, vector<128x128xf32> -> vector<128x128xf32>
    %c0_6 = arith.constant 0 : index
    %c1 = arith.constant 1 : index
    %c0_7 = arith.constant 0 : index
    %c0_8 = arith.constant 0 : index
    %7 = vector.load %arg3[%c0_6, %c1, %c0_7, %c0_8] : memref<1x2x128x128xbf16, #tpu.memory_space<vmem>>, vector<1x1x128x128xbf16>
    %8 = vector.shape_cast %7 : vector<1x1x128x128xbf16> to vector<128x128xbf16>
    %cst_9 = arith.constant dense<0.000000e+00> : vector<128x128xf32>
    %9 = tpu.matmul %3, %8, %cst_9 {dimension_numbers = #tpu.dot_dimension_numbers<[1], [0], [0], [1], [0, 0, 1, 1], [], []>} : vector<128x128xbf16>, vector<128x128xbf16>, vector<128x128xf32> -> vector<128x128xf32>
    %10 = arith.negf %6 : vector<128x128xf32>
    %11 = math.exp %10 : vector<128x128xf32>
    %cst_10 = arith.constant 1.000000e+00 : f32
    %12 = vector.broadcast %cst_10 : f32 to vector<128x128xf32>
    %13 = arith.addf %12, %11 : vector<128x128xf32>
    %14 = arith.divf %12, %13 : vector<128x128xf32>
    %15 = arith.mulf %6, %14 : vector<128x128xf32>
    %16 = arith.mulf %15, %9 : vector<128x128xf32>
    %c0_11 = arith.constant 0 : index
    %c0_12 = arith.constant 0 : index
    %17 = vector.load %arg7[%c0_11, %c0_12] : memref<128x128xf32, #tpu.memory_space<vmem>>, vector<128x128xf32>
    %18 = arith.truncf %16 : vector<128x128xf32> to vector<128x128xbf16>
    %c0_13 = arith.constant 0 : index
    %c0_14 = arith.constant 0 : index
    %c0_15 = arith.constant 0 : index
    %19 = vector.load %arg4[%c0_13, %c0_14, %c0_15] : memref<1x128x128xbf16, #tpu.memory_space<vmem>>, vector<1x128x128xbf16>
    %20 = vector.shape_cast %19 : vector<1x128x128xbf16> to vector<128x128xbf16>
    %cst_16 = arith.constant dense<0.000000e+00> : vector<128x128xf32>
    %21 = tpu.matmul %18, %20, %cst_16 {dimension_numbers = #tpu.dot_dimension_numbers<[1], [0], [0], [1], [0, 0, 1, 1], [], []>} : vector<128x128xbf16>, vector<128x128xbf16>, vector<128x128xf32> -> vector<128x128xf32>
    %22 = arith.addf %17, %21 : vector<128x128xf32>
    %c0_17 = arith.constant 0 : index
    %c0_18 = arith.constant 0 : index
    %23 = vector.load %arg7[%c0_17, %c0_18] : memref<128x128xf32, #tpu.memory_space<vmem>>, vector<128x128xf32>
    tpu.vector_store %arg7[%c0_17, %c0_18], %22 {strides = array<i32>} : memref<128x128xf32, #tpu.memory_space<vmem>>, vector<128x128xf32>,
    %c1_i32 = arith.constant 1 : i32
    %24 = arith.cmpi eq, %arg1, %c1_i32 : i32
    %25 = arith.extui %24 : i1 to i32
    %c0_i32_19 = arith.constant 0 : i32
    %26 = arith.cmpi ne, %25, %c0_i32_19 : i32
    scf.if %26 {
      %c0_20 = arith.constant 0 : index
      %c0_21 = arith.constant 0 : index
      %27 = vector.load %arg7[%c0_20, %c0_21] : memref<128x128xf32, #tpu.memory_space<vmem>>, vector<128x128xf32>
      %c0_22 = arith.constant 0 : index
      %c0_23 = arith.constant 0 : index
      %28 = vector.load %arg5[%c0_22, %c0_23] : memref<128x1xf32, #tpu.memory_space<vmem>>, vector<128x1xf32>
      %29 = vector.broadcast %28 : vector<128x1xf32> to vector<128x128xf32>
      %30 = arith.mulf %27, %29 : vector<128x128xf32>
      %c0_24 = arith.constant 0 : index
      %c0_25 = arith.constant 0 : index
      %c0_26 = arith.constant 0 : index
      %31 = vector.load %arg6[%c0_24, %c0_25, %c0_26] : memref<1x128x128xf32, #tpu.memory_space<vmem>>, vector<1x128x128xf32>
      %32 = vector.shape_cast %31 : vector<1x128x128xf32> to vector<128x128xf32>
      %33 = vector.shape_cast %30 : vector<128x128xf32> to vector<1x128x128xf32>
      tpu.vector_store %arg6[%c0_24, %c0_25, %c0_26], %33 {strides = array<i32>} : memref<1x128x128xf32, #tpu.memory_space<vmem>>, vector<1x128x128xf32>,
    } else {
    }
    return
  }
  func.func @transform_0(%arg0: i32, %arg1: i32) -> (i32, i32) {
    %c0_i32 = arith.constant 0 : i32
    %c0_i32_0 = arith.constant 0 : i32
    %c0_i32_1 = arith.constant 0 : i32
    return %c0_i32, %c0_i32_0 : i32, i32
  }
  func.func @transform_1(%arg0: i32, %arg1: i32) -> (i32, i32, i32, i32) {
    %c2_i32 = arith.constant 2 : i32
    %0 = arith.muli %arg0, %c2_i32 : i32
    %1 = arith.addi %0, %arg1 : i32
    %c0_i32 = arith.constant 0 : i32
    %c0_i32_0 = arith.constant 0 : i32
    %c0_i32_1 = arith.constant 0 : i32
    %c0_i32_2 = arith.constant 0 : i32
    return %1, %c0_i32, %c0_i32_0, %c0_i32_1 : i32, i32, i32, i32
  }
  func.func @transform_2(%arg0: i32, %arg1: i32) -> (i32, i32, i32) {
    %c2_i32 = arith.constant 2 : i32
    %0 = arith.muli %arg0, %c2_i32 : i32
    %1 = arith.addi %0, %arg1 : i32
    %c0_i32 = arith.constant 0 : i32
    %c0_i32_0 = arith.constant 0 : i32
    %c0_i32_1 = arith.constant 0 : i32
    return %1, %c0_i32, %c0_i32_0 : i32, i32, i32
  }
  func.func @transform_3(%arg0: i32, %arg1: i32) -> (i32, i32) {
    %c0_i32 = arith.constant 0 : i32
    %c0_i32_0 = arith.constant 0 : i32
    %c0_i32_1 = arith.constant 0 : i32
    return %c0_i32, %c0_i32_0 : i32, i32
  }
  func.func @transform_4(%arg0: i32, %arg1: i32) -> (i32, i32, i32) {
    %c0_i32 = arith.constant 0 : i32
    %c0_i32_0 = arith.constant 0 : i32
    %c0_i32_1 = arith.constant 0 : i32
    return %arg0, %c0_i32, %c0_i32_0 : i32, i32, i32
  }
}

</mosaic_0001>

<llo_original>
// kernel: ss_mixtral_block_sparse_top2_mlp.1
$region0: #{ss_mixtral_block_sparse_top2_mlp.1}
  #allocation0 [shape = 'u32[]', space=smem, size = 0x4, offset = 0x4, fixed_abs, tag = 'smem constant byte address 0x4 - core index']
  #allocation1 [shape = 'u32[144,128]{1,0:T(1,128)}', space=vmem, size = 0x12000, scoped, tag = 'internal scratch']
  #allocation2 [shape = 'f32[128,128]{1,0:T(8,128)}', space=vmem, size = 0x10000, scoped, tag = 'scratch operand']
  %s0 = inlined_call_operand.vmem [shape: bf16[128,128], index: 0, kind: input, shape index: {}]
  %s1 = inlined_call_operand.hbm [shape: bf16[4,2,128,128], index: 1, kind: input, shape index: {}]
  %s2 = inlined_call_operand.vmem [shape: bf16[4,128,128], index: 2, kind: input, shape index: {}]
  %s3 = inlined_call_operand.vmem [shape: f32[128,1], index: 3, kind: input, shape index: {}]
  %s4 = inlined_call_operand.vmem [shape: f32[2,128,128], index: 4, kind: output, shape index: {}]
  %s5 = sld [smem:[#allocation0]]
  $region61: #{ss_mixtral_block_sparse_top2_mlp.1} parent=0
    _
  %s7 = ssub.s32 1, %s5
  %s8 = scalar_select 0, %s7, %s5
  $region1: #{ss_mixtral_block_sparse_top2_mlp.1} parent=0
    #allocation3 [shape = 'u8[131072]{0}', space=vmem, size = 0x20000, scoped, tag = 'input window, operand 1']
    #allocation4 [shape = 's32[2]{0}', space=sflag, size = 0x8, scoped, tag = 'scoped memory for ss_mixtral_block_sparse_top2_mlp.1']
    %9 = vsyncpa [#allocation4], 0
    %s10 = scalar_lea.sflag [#allocation4], 1
    %11 = vsyncpa %s10, 0
    loop: start=0, step=1, limit=6
    $region2: #{ss_mixtral_block_sparse_top2_mlp.1} parent=1 // loop_pre_header
      _
    $region3: #{ss_mixtral_block_sparse_top2_mlp.1} parent=1 // loop_header
      %s13 = sphi 0, %s17
      %p14 = scmp.ge.s32.totalorder %s13, 6
      %s20 = sphi 0, %s32
      %s21 = sphi 0, %s28
      %s22 = sphi 0, %s20
      %s23 = sphi 0, %s21
      %s24 = sphi 0, %s22
      %s25 = sphi 0, %s23
      %s33 = sphi 0, %s33
      %s35 = sphi 0, %s33
      %s36 = sphi 0, %s35
      %s50 = sphi 0, %s36
      %s60 = sphi 0, %s62
      %s63 = sphi 0, %s60
      %s64 = sphi 0, %s63
      %s80 = sphi 0, %s64
      %s90 = sphi 0, %s92
      %s93 = sphi 0, %s90
      %s94 = sphi 0, %s93
      %s110 = sphi 0, %s94
      %s114 = sphi 0, %s114
      %s116 = sphi 0, %s114
      %s117 = sphi 0, %s116
      %s131 = sphi 0, %s117
      %s137 = sphi 0, %s139
      %s140 = sphi 0, %s137
      %s141 = sphi 0, %s140
      %s157 = sphi 0, %s141
    $region4: #{ss_mixtral_block_sparse_top2_mlp.1} parent=1 // loop_header_branch
      %16 = sbr.rel (%p14) target = $region8
    $region5: #{ss_mixtral_block_sparse_top2_mlp.1} parent=1 // loop_body
      %s18 = ssub.s32 %s13, 1
      %s19 = ssub.s32 %s13, 2
      %s26 = sadd.s32 1, %s21
      %p27 = scmp.ge.s32.totalorder %s26, 2
      %s28 = scalar_select %p27, 0, %s26
      %s29 = sadd.s32 1, %s20
      %s30 = scalar_select %p27, %s29, %s20
      %p31 = scmp.ge.s32.totalorder %s30, 2
      %s32 = scalar_select %p31, 0, %s30
      %s34 = sadd.s32 %s33, 1
      %p37 = scmp.eq.s32.totalorder %s13, 3
      %p38 = scmp.ne.s32.totalorder %s33, %s35
      %p39 = scmp.eq.s32.totalorder %s13, 0
      %p40 = por %p38, %p39
      %p41 = scmp.ne.s32.totalorder %s33, %s35
      %p42 = scmp.eq.s32.totalorder %s18, 3
      %p43 = por %p41, %p42
      %p44 = scmp.ne.s32.totalorder %s35, %s36
      %p45 = scmp.eq.s32.totalorder %s18, 0
      %p46 = por %p44, %p45
      %p47 = scmp.ne.s32.totalorder %s35, %s36
      %p48 = scmp.eq.s32.totalorder %s19, 3
      %p49 = por %p47, %p48
      %p51 = scmp.ne.s32.totalorder %s36, %s50
      %p52 = scmp.eq.s32.totalorder %s19, 0
      %p53 = por %p51, %p52
      %s54 = smul.u32 %s20, 2
      %s55 = sadd.s32 %s54, %s21
      %s56 = smul.u32 %s32, 2
      %s57 = sadd.s32 %s56, %s28
      %s58 = ssub.s32 %s55, %s57
      %p59 = scmp.eq.s32.totalorder %s58, 0
      %s61 = sadd.s32 %s60, 1
      %s62 = scalar_select %p59, %s60, %s61
      %p65 = pneg %p59
      %p66 = scmp.eq.s32.totalorder %s13, 3
      %p67 = por %p65, %p66
      %p68 = scmp.ne.s32.totalorder %s60, %s63
      %p69 = scmp.eq.s32.totalorder %s13, 0
      %p70 = por %p68, %p69
      %p71 = scmp.ne.s32.totalorder %s60, %s63
      %p72 = scmp.eq.s32.totalorder %s18, 3
      %p73 = por %p71, %p72
      %p74 = scmp.ne.s32.totalorder %s63, %s64
      %p75 = scmp.eq.s32.totalorder %s18, 0
      %p76 = por %p74, %p75
      %p77 = scmp.ne.s32.totalorder %s63, %s64
      %p78 = scmp.eq.s32.totalorder %s19, 3
      %p79 = por %p77, %p78
      %p81 = scmp.ne.s32.totalorder %s64, %s80
      %p82 = scmp.eq.s32.totalorder %s19, 0
      %p83 = por %p81, %p82
      %s84 = smul.u32 %s20, 2
      %s85 = sadd.s32 %s84, %s21
      %s86 = smul.u32 %s32, 2
      %s87 = sadd.s32 %s86, %s28
      %s88 = ssub.s32 %s85, %s87
      %p89 = scmp.eq.s32.totalorder %s88, 0
      %s91 = sadd.s32 %s90, 1
      %s92 = scalar_select %p89, %s90, %s91
      %p95 = pneg %p89
      %p96 = scmp.eq.s32.totalorder %s13, 3
      %p97 = por %p95, %p96
      %p98 = scmp.ne.s32.totalorder %s90, %s93
      %p99 = scmp.eq.s32.totalorder %s13, 0
      %p100 = por %p98, %p99
      %p101 = scmp.ne.s32.totalorder %s90, %s93
      %p102 = scmp.eq.s32.totalorder %s18, 3
      %p103 = por %p101, %p102
      %p104 = scmp.ne.s32.totalorder %s93, %s94
      %p105 = scmp.eq.s32.totalorder %s18, 0
      %p106 = por %p104, %p105
      %p107 = scmp.ne.s32.totalorder %s93, %s94
      %p108 = scmp.eq.s32.totalorder %s19, 3
      %p109 = por %p107, %p108
      %p111 = scmp.ne.s32.totalorder %s94, %s110
      %p112 = scmp.eq.s32.totalorder %s19, 0
      %p113 = por %p111, %p112
      %s115 = sadd.s32 %s114, 1
      %p118 = scmp.eq.s32.totalorder %s13, 3
      %p119 = scmp.ne.s32.totalorder %s114, %s116
      %p120 = scmp.eq.s32.totalorder %s13, 0
      %p121 = por %p119, %p120
      %p122 = scmp.ne.s32.totalorder %s114, %s116
      %p123 = scmp.eq.s32.totalorder %s18, 3
      %p124 = por %p122, %p123
      %p125 = scmp.ne.s32.totalorder %s116, %s117
      %p126 = scmp.eq.s32.totalorder %s18, 0
      %p127 = por %p125, %p126
      %p128 = scmp.ne.s32.totalorder %s116, %s117
      %p129 = scmp.eq.s32.totalorder %s19, 3
      %p130 = por %p128, %p129
      %p132 = scmp.ne.s32.totalorder %s117, %s131
      %p133 = scmp.eq.s32.totalorder %s19, 0
      %p134 = por %p132, %p133
      %s135 = ssub.s32 %s20, %s32
      %p136 = scmp.eq.s32.totalorder %s135, 0
      %s138 = sadd.s32 %s137, 1
      %s139 = scalar_select %p136, %s137, %s138
      %p142 = pneg %p136
      %p143 = scmp.eq.s32.totalorder %s13, 3
      %p144 = por %p142, %p143
      %p145 = scmp.ne.s32.totalorder %s137, %s140
      %p146 = scmp.eq.s32.totalorder %s13, 0
      %p147 = por %p145, %p146
      %p148 = scmp.ne.s32.totalorder %s137, %s140
      %p149 = scmp.eq.s32.totalorder %s18, 3
      %p150 = por %p148, %p149
      %p151 = scmp.ne.s32.totalorder %s140, %s141
      %p152 = scmp.eq.s32.totalorder %s18, 0
      %p153 = por %p151, %p152
      %p154 = scmp.ne.s32.totalorder %s140, %s141
      %p155 = scmp.eq.s32.totalorder %s19, 3
      %p156 = por %p154, %p155
      %p158 = scmp.ne.s32.totalorder %s141, %s157
      %p159 = scmp.eq.s32.totalorder %s19, 0
      %p160 = por %p158, %p159
      %p161 = scmp.le.s32.totalorder 1, %s13
      %p162 = scmp.lt.s32.totalorder %s13, 5
      %p163 = pnand %p161, %p162
      %p164 = pneg %p163
      // Predicated region
      $region9: #{ss_mixtral_block_sparse_top2_mlp.1} parent=5 // pred_check
        _
      $region10: #{ss_mixtral_block_sparse_top2_mlp.1} parent=5 // pred_check_branch
        %166 = sbr.rel (%p163) target = $region12
      $region11: #{ss_mixtral_block_sparse_top2_mlp.1} parent=5 // pred_region
        %s167 = ssub.s32 %s13, 1
        // Predicated region
        $region13: #{ss_mixtral_block_sparse_top2_mlp.1} parent=11 // pred_check
          %p168 = pneg %p46
        $region14: #{ss_mixtral_block_sparse_top2_mlp.1} parent=11 // pred_check_branch
          %170 = sbr.rel (%p168) target = $region16
        $region15: #{ss_mixtral_block_sparse_top2_mlp.1} parent=11 // pred_region
          _
        $region16: #{ss_mixtral_block_sparse_top2_mlp.1} parent=11 // pred_fallthru
          _
        // Predicated region
        $region17: #{ss_mixtral_block_sparse_top2_mlp.1} parent=11 // pred_check
          %p171 = pneg %p127
        $region18: #{ss_mixtral_block_sparse_top2_mlp.1} parent=11 // pred_check_branch
          %173 = sbr.rel (%p171) target = $region20
        $region19: #{ss_mixtral_block_sparse_top2_mlp.1} parent=11 // pred_region
          _
        $region20: #{ss_mixtral_block_sparse_top2_mlp.1} parent=11 // pred_fallthru
          _
      $region12: #{ss_mixtral_block_sparse_top2_mlp.1} parent=5 // pred_fallthru
        _
      %p174 = scmp.lt.s32.totalorder %s13, 4
      // Predicated region
      $region21: #{ss_mixtral_block_sparse_top2_mlp.1} parent=5 // pred_check
        %p175 = pneg %p174
      $region22: #{ss_mixtral_block_sparse_top2_mlp.1} parent=5 // pred_check_branch
        %177 = sbr.rel (%p175) target = $region24
      $region23: #{ss_mixtral_block_sparse_top2_mlp.1} parent=5 // pred_region
        // Predicated region
        $region25: #{ss_mixtral_block_sparse_top2_mlp.1} parent=23 // pred_check
          %p178 = pneg %p70
        $region26: #{ss_mixtral_block_sparse_top2_mlp.1} parent=23 // pred_check_branch
          %180 = sbr.rel (%p178) target = $region28
        $region27: #{ss_mixtral_block_sparse_top2_mlp.1} parent=23 // pred_region
          %s181 = sand.u32 %s60, 1
          %s182 = scalar_lea.sflag [#allocation4], %s181
          %s183 = sand.u32 %s60, 1
          %s184 = smul.addr %s183, 128
          %s185 = scalar_lea.vmem [#allocation3], %s184
          %s186 = smul.u32 %s20, 2
          %s187 = sadd.s32 %s186, %s21
          %s189 = ssub.s32 2048, 2048
          %190 = vsyncadd %s182, %s189
          %s191 = smul.addr %s187, 32
          %s192 = smul.addr %s191, 64
          %s193 = scalar_lea.hbm %s1, %s192
          %s194 = sshll.u32 %s185, 4
          %s195 = int_to_ptr.vmem [resolvable:$true] %s194
          %200 = dma.hbm_to_vmem [thread:$0]  %s193, 2048, %s195, %s182, 64, 64, 4
        $region28: #{ss_mixtral_block_sparse_top2_mlp.1} parent=23 // pred_fallthru
          _
        // Predicated region
        $region29: #{ss_mixtral_block_sparse_top2_mlp.1} parent=23 // pred_check
          %p201 = pneg %p100
        $region30: #{ss_mixtral_block_sparse_top2_mlp.1} parent=23 // pred_check_branch
          %203 = sbr.rel (%p201) target = $region32
        $region31: #{ss_mixtral_block_sparse_top2_mlp.1} parent=23 // pred_region
          %s204 = smul.u32 %s20, 2
          %s205 = sadd.s32 %s204, %s21
          %p206 = scmp.lt.s32.totalorder %s205, 3
          %s207 = scalar_select %p206, %s205, 3
          %s208 = smul.addr %s207, 16
          %s209 = smul.addr %s208, 4
          %s210 = scalar_lea.vmem %s2, %s209
          %s211 = smul.u32 %s20, 2
          %s212 = sadd.s32 %s211, %s21
        $region32: #{ss_mixtral_block_sparse_top2_mlp.1} parent=23 // pred_fallthru
          _
      $region24: #{ss_mixtral_block_sparse_top2_mlp.1} parent=5 // pred_fallthru
        _
      %p213 = scmp.le.s32.totalorder 1, %s13
      %p214 = scmp.lt.s32.totalorder %s13, 5
      %p215 = pnand %p213, %p214
      %p216 = pneg %p215
      // Predicated region
      $region33: #{ss_mixtral_block_sparse_top2_mlp.1} parent=5 // pred_check
        _
      $region34: #{ss_mixtral_block_sparse_top2_mlp.1} parent=5 // pred_check_branch
        %218 = sbr.rel (%p215) target = $region36
      $region35: #{ss_mixtral_block_sparse_top2_mlp.1} parent=5 // pred_region
        %s219 = ssub.s32 %s13, 1
        %s220 = sand.u32 %s63, 1
        %s221 = scalar_lea.sflag [#allocation4], %s220
        %s222 = sand.u32 %s63, 1
        %s223 = smul.addr %s222, 128
        %s224 = scalar_lea.vmem [#allocation3], %s223
        // Predicated region
        $region37: #{ss_mixtral_block_sparse_top2_mlp.1} parent=35 // pred_check
          %p225 = pneg %p76
        $region38: #{ss_mixtral_block_sparse_top2_mlp.1} parent=35 // pred_check_branch
          %227 = sbr.rel (%p225) target = $region40
        $region39: #{ss_mixtral_block_sparse_top2_mlp.1} parent=35 // pred_region
          %228 = dma.done %s221, 2048
        $region40: #{ss_mixtral_block_sparse_top2_mlp.1} parent=35 // pred_fallthru
          _
        %p229 = pneg %p46
        %p230 = pneg %p43
        %s231 = sand.u32 %s63, 1
        %s232 = scalar_lea.sflag [#allocation4], %s231
        %s233 = sand.u32 %s63, 1
        %s234 = smul.addr %s233, 128
        %s235 = scalar_lea.vmem [#allocation3], %s234
        %p236 = pneg %p76
        %p237 = pneg %p73
        %s238 = smul.u32 %s22, 2
        %s239 = sadd.s32 %s238, %s23
        %p240 = scmp.lt.s32.totalorder %s239, 3
        %s241 = scalar_select %p240, %s239, 3
        %s242 = smul.addr %s241, 16
        %s243 = smul.addr %s242, 4
        %s244 = scalar_lea.vmem %s2, %s243
        %p245 = pneg %p106
        %p246 = pneg %p103
        %p247 = pneg %p127
        %p248 = pneg %p124
        %p249 = pneg %p153
        %p250 = pneg %p150
        %p251 = scmp.lt.s32.totalorder %s22, 1
        %s252 = scalar_select %p251, %s22, 1
        %s253 = smul.addr %s252, 16
        %s254 = smul.addr %s253, 8
        %s255 = scalar_lea.vmem %s4, %s254
        %s256 = smul.u32 %s22, 2
        %s257 = sadd.s32 %s256, %s23
        %s258 = smul.u32 %s22, 2
        %s259 = sadd.s32 %s258, %s23
        %p260 = scmp.lt.s32.totalorder %s259, 3
        %s261 = scalar_select %p260, %s259, 3
        %s262 = smul.addr %s261, 16
        %s263 = smul.addr %s262, 4
        %s264 = scalar_lea.vmem %s2, %s263
        %s265 = smul.u32 %s22, 2
        %s266 = sadd.s32 %s265, %s23
        %p267 = scmp.lt.s32.totalorder %s22, 1
        %s268 = scalar_select %p267, %s22, 1
        %s269 = smul.addr %s268, 16
        %s270 = smul.addr %s269, 8
        %s271 = scalar_lea.vmem %s4, %s270
        %p273 = scmp.eq.s32.totalorder %s23, 0
        // Predicated region
        $region41: #{ss_mixtral_block_sparse_top2_mlp.1} parent=35 // pred_check
          %p274 = pneg %p273
        $region42: #{ss_mixtral_block_sparse_top2_mlp.1} parent=35 // pred_check_branch
          %276 = sbr.rel (%p274) target = $region44
        $region43: #{ss_mixtral_block_sparse_top2_mlp.1} parent=35 // pred_region
          %277 = vst [vmem:[#allocation2] sm:$0xff] 0.0
          %278 = vst [vmem:[#allocation2 + $0x8] sm:$0xff] 0.0
          %279 = vst [vmem:[#allocation2 + $0x10] sm:$0xff] 0.0
          %280 = vst [vmem:[#allocation2 + $0x18] sm:$0xff] 0.0
          %281 = vst [vmem:[#allocation2 + $0x20] sm:$0xff] 0.0
          %282 = vst [vmem:[#allocation2 + $0x28] sm:$0xff] 0.0
          %283 = vst [vmem:[#allocation2 + $0x30] sm:$0xff] 0.0
          %284 = vst [vmem:[#allocation2 + $0x38] sm:$0xff] 0.0
          %285 = vst [vmem:[#allocation2 + $0x40] sm:$0xff] 0.0
          %286 = vst [vmem:[#allocation2 + $0x48] sm:$0xff] 0.0
          %287 = vst [vmem:[#allocation2 + $0x50] sm:$0xff] 0.0
          %288 = vst [vmem:[#allocation2 + $0x58] sm:$0xff] 0.0
          %289 = vst [vmem:[#allocation2 + $0x60] sm:$0xff] 0.0
          %290 = vst [vmem:[#allocation2 + $0x68] sm:$0xff] 0.0
          %291 = vst [vmem:[#allocation2 + $0x70] sm:$0xff] 0.0
          %292 = vst [vmem:[#allocation2 + $0x78] sm:$0xff] 0.0
        $region44: #{ss_mixtral_block_sparse_top2_mlp.1} parent=35 // pred_fallthru
          _
        %v293 = vld [vmem:[%s0] sm:$0xf]
        %v294 = vld [vmem:[%s0 + $0x4] sm:$0xf]
        %v295 = vld [vmem:[%s0 + $0x8] sm:$0xf]
        %v296 = vld [vmem:[%s0 + $0xc] sm:$0xf]
        %v297 = vld [vmem:[%s0 + $0x10] sm:$0xf]
        %v298 = vld [vmem:[%s0 + $0x14] sm:$0xf]
        %v299 = vld [vmem:[%s0 + $0x18] sm:$0xf]
        %v300 = vld [vmem:[%s0 + $0x1c] sm:$0xf]
        %v301 = vld [vmem:[%s0 + $0x20] sm:$0xf]
        %v302 = vld [vmem:[%s0 + $0x24] sm:$0xf]
        %v303 = vld [vmem:[%s0 + $0x28] sm:$0xf]
        %v304 = vld [vmem:[%s0 + $0x2c] sm:$0xf]
        %v305 = vld [vmem:[%s0 + $0x30] sm:$0xf]
        %v306 = vld [vmem:[%s0 + $0x34] sm:$0xf]
        %v307 = vld [vmem:[%s0 + $0x38] sm:$0xf]
        %v308 = vld [vmem:[%s0 + $0x3c] sm:$0xf]
        %v309 = vld [vmem:[%s224] sm:$0xf]
        %v310 = vld [vmem:[%s224 + $0x4] sm:$0xf]
        %v311 = vld [vmem:[%s224 + $0x8] sm:$0xf]
        %v312 = vld [vmem:[%s224 + $0xc] sm:$0xf]
        %v313 = vld [vmem:[%s224 + $0x10] sm:$0xf]
        %v314 = vld [vmem:[%s224 + $0x14] sm:$0xf]
        %v315 = vld [vmem:[%s224 + $0x18] sm:$0xf]
        %v316 = vld [vmem:[%s224 + $0x1c] sm:$0xf]
        %v317 = vld [vmem:[%s224 + $0x20] sm:$0xf]
        %v318 = vld [vmem:[%s224 + $0x24] sm:$0xf]
        %v319 = vld [vmem:[%s224 + $0x28] sm:$0xf]
        %v320 = vld [vmem:[%s224 + $0x2c] sm:$0xf]
        %v321 = vld [vmem:[%s224 + $0x30] sm:$0xf]
        %v322 = vld [vmem:[%s224 + $0x34] sm:$0xf]
        %v323 = vld [vmem:[%s224 + $0x38] sm:$0xf]
        %v324 = vld [vmem:[%s224 + $0x3c] sm:$0xf]
        %v341 = vunpack.c.l.b16 %v293
        %v342 = vunpack.c.l.b16 %v294
        %v343 = vunpack.c.l.b16 %v295
        %v344 = vunpack.c.l.b16 %v296
        %v345 = vunpack.c.l.b16 %v297
        %v346 = vunpack.c.l.b16 %v298
        %v347 = vunpack.c.l.b16 %v299
        %v348 = vunpack.c.l.b16 %v300
        %v349 = vunpack.c.l.b16 %v301
        %v350 = vunpack.c.l.b16 %v302
        %v351 = vunpack.c.l.b16 %v303
        %v352 = vunpack.c.l.b16 %v304
        %v353 = vunpack.c.l.b16 %v305
        %v354 = vunpack.c.l.b16 %v306
        %v355 = vunpack.c.l.b16 %v307
        %v356 = vunpack.c.l.b16 %v308
        %v357 = vpack.c.b16 %v342, %v341
        %v358 = vpack.c.b16 %v344, %v343
        %v359 = vpack.c.b16 %v346, %v345
        %v360 = vpack.c.b16 %v348, %v347
        %v361 = vpack.c.b16 %v350, %v349
        %v362 = vpack.c.b16 %v352, %v351
        %v363 = vpack.c.b16 %v354, %v353
        %v364 = vpack.c.b16 %v356, %v355
        %v389 = vunpack.c.l.b16 %v309
        %v390 = vunpack.c.l.b16 %v310
        %v391 = vunpack.c.l.b16 %v311
        %v392 = vunpack.c.l.b16 %v312
        %v393 = vunpack.c.l.b16 %v313
        %v394 = vunpack.c.l.b16 %v314
        %v395 = vunpack.c.l.b16 %v315
        %v396 = vunpack.c.l.b16 %v316
        %v397 = vunpack.c.l.b16 %v317
        %v398 = vunpack.c.l.b16 %v318
        %v399 = vunpack.c.l.b16 %v319
        %v400 = vunpack.c.l.b16 %v320
        %v401 = vunpack.c.l.b16 %v321
        %v402 = vunpack.c.l.b16 %v322
        %v403 = vunpack.c.l.b16 %v323
        %v404 = vunpack.c.l.b16 %v324
        %v405 = vpack.c.b16 %v390, %v389
        %v406 = vpack.c.b16 %v392, %v391
        %v407 = vpack.c.b16 %v394, %v393
        %v408 = vpack.c.b16 %v396, %v395
        %v409 = vpack.c.b16 %v398, %v397
        %v410 = vpack.c.b16 %v400, %v399
        %v411 = vpack.c.b16 %v402, %v401
        %v412 = vpack.c.b16 %v404, %v403
        %421 = vmatprep.subr.bf16.mxu0 0
        %422 = vmatpush1.bf16.msra.mxu0 %v405
        %423 = vmatprep.subr.bf16.mxu0 0
        %424 = vmatpush1.bf16.msra.mxu0 %v406
        %425 = vmatprep.subr.bf16.mxu0 0
        %426 = vmatpush1.bf16.msra.mxu0 %v407
        %427 = vmatprep.subr.bf16.mxu0 0
        %428 = vmatpush1.bf16.msra.mxu0 %v408
        %429 = vmatprep.subr.bf16.mxu0 0
        %430 = vmatpush1.bf16.msra.mxu0 %v409
        %431 = vmatprep.subr.bf16.mxu0 0
        %432 = vmatpush1.bf16.msra.mxu0 %v410
        %433 = vmatprep.subr.bf16.mxu0 0
        %434 = vmatpush1.bf16.msra.mxu0 %v411
        %435 = vmatprep.subr.bf16.mxu0 0
        %436 = vmatpush1.bf16.msra.mxu0 %v412
        %437 = vmatprep.subr.bf16.mxu0 0
        %438 = vmatpush1.bf16.msra.mxu0 0
        %439 = vmatprep.subr.bf16.mxu0 0
        %440 = vmatpush1.bf16.msra.mxu0 0
        %441 = vmatprep.subr.bf16.mxu0 0
        %442 = vmatpush1.bf16.msra.mxu0 0
        %443 = vmatprep.subr.bf16.mxu0 0
        %444 = vmatpush1.bf16.msra.mxu0 0
        %445 = vmatprep.subr.bf16.mxu0 0
        %446 = vmatpush1.bf16.msra.mxu0 0
        %447 = vmatprep.subr.bf16.mxu0 0
        %448 = vmatpush1.bf16.msra.mxu0 0
        %449 = vmatprep.subr.bf16.mxu0 0
        %450 = vmatpush1.bf16.msra.mxu0 0
        %451 = vmatprep.subr.bf16.mxu0 0
        %452 = vmatpush1.bf16.msra.mxu0 0
        %453 = vmatprep.mubr.bf16.mxu0 0
        %454 = vmatmul.mubr.bf16.gmra.mrb[0].mxu0 %v357
        %v455 = vpop.f32.mrb[0].mxu0
        %v456 = vadd.f32 0.0, %v455
        %v457 = vpop.f32.mrb[0].mxu0
        %v458 = vpop.f32.mrb[0].mxu0
        %v459 = vadd.f32 0.0, %v458
        %v460 = vpop.f32.mrb[0].mxu0
        %461 = vmatprep.mubr.bf16.mxu0 0
        %462 = vmatmul.mubr.bf16.gmra.mrb[0].mxu0 %v358
        %v463 = vpop.f32.mrb[0].mxu0
        %v464 = vadd.f32 0.0, %v463
        %v465 = vpop.f32.mrb[0].mxu0
        %v466 = vpop.f32.mrb[0].mxu0
        %v467 = vadd.f32 0.0, %v466
        %v468 = vpop.f32.mrb[0].mxu0
        %469 = vmatprep.mubr.bf16.mxu0 0
        %470 = vmatmul.mubr.bf16.gmra.mrb[0].mxu0 %v359
        %v471 = vpop.f32.mrb[0].mxu0
        %v472 = vadd.f32 0.0, %v471
        %v473 = vpop.f32.mrb[0].mxu0
        %v474 = vpop.f32.mrb[0].mxu0
        %v475 = vadd.f32 0.0, %v474
        %v476 = vpop.f32.mrb[0].mxu0
        %477 = vmatprep.mubr.bf16.mxu0 0
        %478 = vmatmul.mubr.bf16.gmra.mrb[0].mxu0 %v360
        %v479 = vpop.f32.mrb[0].mxu0
        %v480 = vadd.f32 0.0, %v479
        %v481 = vpop.f32.mrb[0].mxu0
        %v482 = vpop.f32.mrb[0].mxu0
        %v483 = vadd.f32 0.0, %v482
        %v484 = vpop.f32.mrb[0].mxu0
        %485 = vmatprep.mubr.bf16.mxu0 0
        %486 = vmatmul.mubr.bf16.gmra.mrb[0].mxu0 %v361
        %v487 = vpop.f32.mrb[0].mxu0
        %v488 = vadd.f32 0.0, %v487
        %v489 = vpop.f32.mrb[0].mxu0
        %v490 = vpop.f32.mrb[0].mxu0
        %v491 = vadd.f32 0.0, %v490
        %v492 = vpop.f32.mrb[0].mxu0
        %493 = vmatprep.mubr.bf16.mxu0 0
        %494 = vmatmul.mubr.bf16.gmra.mrb[0].mxu0 %v362
        %v495 = vpop.f32.mrb[0].mxu0
        %v496 = vadd.f32 0.0, %v495
        %v497 = vpop.f32.mrb[0].mxu0
        %v498 = vpop.f32.mrb[0].mxu0
        %v499 = vadd.f32 0.0, %v498
        %v500 = vpop.f32.mrb[0].mxu0
        %501 = vmatprep.mubr.bf16.mxu0 0
        %502 = vmatmul.mubr.bf16.gmra.mrb[0].mxu0 %v363
        %v503 = vpop.f32.mrb[0].mxu0
        %v504 = vadd.f32 0.0, %v503
        %v505 = vpop.f32.mrb[0].mxu0
        %v506 = vpop.f32.mrb[0].mxu0
        %v507 = vadd.f32 0.0, %v506
        %v508 = vpop.f32.mrb[0].mxu0
        %509 = vmatprep.mubr.bf16.mxu0 0
        %510 = vmatmul.mubr.bf16.gmra.mrb[0].mxu0 %v364
        %v511 = vpop.f32.mrb[0].mxu0
        %v512 = vadd.f32 0.0, %v511
        %v513 = vpop.f32.mrb[0].mxu0
        %v514 = vpop.f32.mrb[0].mxu0
        %v515 = vadd.f32 0.0, %v514
        %v516 = vpop.f32.mrb[0].mxu0
        %517 = vdwg.mxu0
        %s518 = scalar_lea.vmem %s224, 64 [#allocation3]
        %v519 = vld [vmem:[%s518] sm:$0xf]
        %v520 = vld [vmem:[%s518 + $0x4] sm:$0xf]
        %v521 = vld [vmem:[%s518 + $0x8] sm:$0xf]
        %v522 = vld [vmem:[%s518 + $0xc] sm:$0xf]
        %v523 = vld [vmem:[%s518 + $0x10] sm:$0xf]
        %v524 = vld [vmem:[%s518 + $0x14] sm:$0xf]
        %v525 = vld [vmem:[%s518 + $0x18] sm:$0xf]
        %v526 = vld [vmem:[%s518 + $0x1c] sm:$0xf]
        %v527 = vld [vmem:[%s518 + $0x20] sm:$0xf]
        %v528 = vld [vmem:[%s518 + $0x24] sm:$0xf]
        %v529 = vld [vmem:[%s518 + $0x28] sm:$0xf]
        %v530 = vld [vmem:[%s518 + $0x2c] sm:$0xf]
        %v531 = vld [vmem:[%s518 + $0x30] sm:$0xf]
        %v532 = vld [vmem:[%s518 + $0x34] sm:$0xf]
        %v533 = vld [vmem:[%s518 + $0x38] sm:$0xf]
        %v534 = vld [vmem:[%s518 + $0x3c] sm:$0xf]
        %v551 = vunpack.c.l.b16 %v519
        %v552 = vunpack.c.l.b16 %v520
        %v553 = vunpack.c.l.b16 %v521
        %v554 = vunpack.c.l.b16 %v522
        %v555 = vunpack.c.l.b16 %v523
        %v556 = vunpack.c.l.b16 %v524
        %v557 = vunpack.c.l.b16 %v525
        %v558 = vunpack.c.l.b16 %v526
        %v559 = vunpack.c.l.b16 %v527
        %v560 = vunpack.c.l.b16 %v528
        %v561 = vunpack.c.l.b16 %v529
        %v562 = vunpack.c.l.b16 %v530
        %v563 = vunpack.c.l.b16 %v531
        %v564 = vunpack.c.l.b16 %v532
        %v565 = vunpack.c.l.b16 %v533
        %v566 = vunpack.c.l.b16 %v534
        %v567 = vpack.c.b16 %v552, %v551
        %v568 = vpack.c.b16 %v554, %v553
        %v569 = vpack.c.b16 %v556, %v555
        %v570 = vpack.c.b16 %v558, %v557
        %v571 = vpack.c.b16 %v560, %v559
        %v572 = vpack.c.b16 %v562, %v561
        %v573 = vpack.c.b16 %v564, %v563
        %v574 = vpack.c.b16 %v566, %v565
        %583 = vmatprep.subr.bf16.mxu0 0
        %584 = vmatpush1.bf16.msra.mxu0 %v567
        %585 = vmatprep.subr.bf16.mxu0 0
        %586 = vmatpush1.bf16.msra.mxu0 %v568
        %587 = vmatprep.subr.bf16.mxu0 0
        %588 = vmatpush1.bf16.msra.mxu0 %v569
        %589 = vmatprep.subr.bf16.mxu0 0
        %590 = vmatpush1.bf16.msra.mxu0 %v570
        %591 = vmatprep.subr.bf16.mxu0 0
        %592 = vmatpush1.bf16.msra.mxu0 %v571
        %593 = vmatprep.subr.bf16.mxu0 0
        %594 = vmatpush1.bf16.msra.mxu0 %v572
        %595 = vmatprep.subr.bf16.mxu0 0
        %596 = vmatpush1.bf16.msra.mxu0 %v573
        %597 = vmatprep.subr.bf16.mxu0 0
        %598 = vmatpush1.bf16.msra.mxu0 %v574
        %599 = vmatprep.subr.bf16.mxu0 0
        %600 = vmatpush1.bf16.msra.mxu0 0
        %601 = vmatprep.subr.bf16.mxu0 0
        %602 = vmatpush1.bf16.msra.mxu0 0
        %603 = vmatprep.subr.bf16.mxu0 0
        %604 = vmatpush1.bf16.msra.mxu0 0
        %605 = vmatprep.subr.bf16.mxu0 0
        %606 = vmatpush1.bf16.msra.mxu0 0
        %607 = vmatprep.subr.bf16.mxu0 0
        %608 = vmatpush1.bf16.msra.mxu0 0
        %609 = vmatprep.subr.bf16.mxu0 0
        %610 = vmatpush1.bf16.msra.mxu0 0
        %611 = vmatprep.subr.bf16.mxu0 0
        %612 = vmatpush1.bf16.msra.mxu0 0
        %613 = vmatprep.subr.bf16.mxu0 0
        %614 = vmatpush1.bf16.msra.mxu0 0
        %615 = vmatprep.mubr.bf16.mxu0 0
        %616 = vmatmul.mubr.bf16.gmra.mrb[0].mxu0 %v357
        %v617 = vpop.f32.mrb[0].mxu0
        %v618 = vadd.f32 0.0, %v617
        %v619 = vpop.f32.mrb[0].mxu0
        %v620 = vpop.f32.mrb[0].mxu0
        %v621 = vadd.f32 0.0, %v620
        %v622 = vpop.f32.mrb[0].mxu0
        %623 = vmatprep.mubr.bf16.mxu0 0
        %624 = vmatmul.mubr.bf16.gmra.mrb[0].mxu0 %v358
        %v625 = vpop.f32.mrb[0].mxu0
        %v626 = vadd.f32 0.0, %v625
        %v627 = vpop.f32.mrb[0].mxu0
        %v628 = vpop.f32.mrb[0].mxu0
        %v629 = vadd.f32 0.0, %v628
        %v630 = vpop.f32.mrb[0].mxu0
        %631 = vmatprep.mubr.bf16.mxu0 0
        %632 = vmatmul.mubr.bf16.gmra.mrb[0].mxu0 %v359
        %v633 = vpop.f32.mrb[0].mxu0
        %v634 = vadd.f32 0.0, %v633
        %v635 = vpop.f32.mrb[0].mxu0
        %v636 = vpop.f32.mrb[0].mxu0
        %v637 = vadd.f32 0.0, %v636
        %v638 = vpop.f32.mrb[0].mxu0
        %639 = vmatprep.mubr.bf16.mxu0 0
        %640 = vmatmul.mubr.bf16.gmra.mrb[0].mxu0 %v360
        %v641 = vpop.f32.mrb[0].mxu0
        %v642 = vadd.f32 0.0, %v641
        %v643 = vpop.f32.mrb[0].mxu0
        %v644 = vpop.f32.mrb[0].mxu0
        %v645 = vadd.f32 0.0, %v644
        %v646 = vpop.f32.mrb[0].mxu0
        %647 = vmatprep.mubr.bf16.mxu0 0
        %648 = vmatmul.mubr.bf16.gmra.mrb[0].mxu0 %v361
        %v649 = vpop.f32.mrb[0].mxu0
        %v650 = vadd.f32 0.0, %v649
        %v651 = vpop.f32.mrb[0].mxu0
        %v652 = vpop.f32.mrb[0].mxu0
        %v653 = vadd.f32 0.0, %v652
        %v654 = vpop.f32.mrb[0].mxu0
        %655 = vmatprep.mubr.bf16.mxu0 0
        %656 = vmatmul.mubr.bf16.gmra.mrb[0].mxu0 %v362
        %v657 = vpop.f32.mrb[0].mxu0
        %v658 = vadd.f32 0.0, %v657
        %v659 = vpop.f32.mrb[0].mxu0
        %v660 = vpop.f32.mrb[0].mxu0
        %v661 = vadd.f32 0.0, %v660
        %v662 = vpop.f32.mrb[0].mxu0
        %663 = vmatprep.mubr.bf16.mxu0 0
        %664 = vmatmul.mubr.bf16.gmra.mrb[0].mxu0 %v363
        %v665 = vpop.f32.mrb[0].mxu0
        %v666 = vadd.f32 0.0, %v665
        %v667 = vpop.f32.mrb[0].mxu0
        %v668 = vpop.f32.mrb[0].mxu0
        %v669 = vadd.f32 0.0, %v668
        %v670 = vpop.f32.mrb[0].mxu0
        %671 = vmatprep.mubr.bf16.mxu0 0
        %672 = vmatmul.mubr.bf16.gmra.mrb[0].mxu0 %v364
        %v673 = vpop.f32.mrb[0].mxu0
        %v674 = vadd.f32 0.0, %v673
        %v675 = vpop.f32.mrb[0].mxu0
        %v676 = vpop.f32.mrb[0].mxu0
        %v677 = vadd.f32 0.0, %v676
        %v678 = vpop.f32.mrb[0].mxu0
        %679 = vdwg.mxu0
        %v680 = vxor.u32 %v456, 2147483648
        %v681 = vxor.u32 %v459, 2147483648
        %v682 = vxor.u32 %v464, 2147483648
        %v683 = vxor.u32 %v467, 2147483648
        %v684 = vxor.u32 %v472, 2147483648
        %v685 = vxor.u32 %v475, 2147483648
        %v686 = vxor.u32 %v480, 2147483648
        %v687 = vxor.u32 %v483, 2147483648
        %v688 = vxor.u32 %v488, 2147483648
        %v689 = vxor.u32 %v491, 2147483648
        %v690 = vxor.u32 %v496, 2147483648
        %v691 = vxor.u32 %v499, 2147483648
        %v692 = vxor.u32 %v504, 2147483648
        %v693 = vxor.u32 %v507, 2147483648
        %v694 = vxor.u32 %v512, 2147483648
        %v695 = vxor.u32 %v515, 2147483648
        %v696 = vmul.f32 %v680, 1.442695
        %v697 = vpow.pop %v696
        %v698 = vmul.f32 %v681, 1.442695
        %v699 = vpow.pop %v698
        %v700 = vmul.f32 %v682, 1.442695
        %v701 = vpow.pop %v700
        %v702 = vmul.f32 %v683, 1.442695
        %v703 = vpow.pop %v702
        %v704 = vmul.f32 %v684, 1.442695
        %v705 = vpow.pop %v704
        %v706 = vmul.f32 %v685, 1.442695
        %v707 = vpow.pop %v706
        %v708 = vmul.f32 %v686, 1.442695
        %v709 = vpow.pop %v708
        %v710 = vmul.f32 %v687, 1.442695
        %v711 = vpow.pop %v710
        %v712 = vmul.f32 %v688, 1.442695
        %v713 = vpow.pop %v712
        %v714 = vmul.f32 %v689, 1.442695
        %v715 = vpow.pop %v714
        %v716 = vmul.f32 %v690, 1.442695
        %v717 = vpow.pop %v716
        %v718 = vmul.f32 %v691, 1.442695
        %v719 = vpow.pop %v718
        %v720 = vmul.f32 %v692, 1.442695
        %v721 = vpow.pop %v720
        %v722 = vmul.f32 %v693, 1.442695
        %v723 = vpow.pop %v722
        %v724 = vmul.f32 %v694, 1.442695
        %v725 = vpow.pop %v724
        %v726 = vmul.f32 %v695, 1.442695
        %v727 = vpow.pop %v726
        %v728 = vadd.f32 %v697, 1.0
        %v729 = vadd.f32 %v699, 1.0
        %v730 = vadd.f32 %v701, 1.0
        %v731 = vadd.f32 %v703, 1.0
        %v732 = vadd.f32 %v705, 1.0
        %v733 = vadd.f32 %v707, 1.0
        %v734 = vadd.f32 %v709, 1.0
        %v735 = vadd.f32 %v711, 1.0
        %v736 = vadd.f32 %v713, 1.0
        %v737 = vadd.f32 %v715, 1.0
        %v738 = vadd.f32 %v717, 1.0
        %v739 = vadd.f32 %v719, 1.0
        %v740 = vadd.f32 %v721, 1.0
        %v741 = vadd.f32 %v723, 1.0
        %v742 = vadd.f32 %v725, 1.0
        %v743 = vadd.f32 %v727, 1.0
        %v744 = vrcp.pop %v728
        %v745 = vmul.f32 1.0, %v744
        %v746 = vrcp.pop %v729
        %v747 = vmul.f32 1.0, %v746
        %v748 = vrcp.pop %v730
        %v749 = vmul.f32 1.0, %v748
        %v750 = vrcp.pop %v731
        %v751 = vmul.f32 1.0, %v750
        %v752 = vrcp.pop %v732
        %v753 = vmul.f32 1.0, %v752
        %v754 = vrcp.pop %v733
        %v755 = vmul.f32 1.0, %v754
        %v756 = vrcp.pop %v734
        %v757 = vmul.f32 1.0, %v756
        %v758 = vrcp.pop %v735
        %v759 = vmul.f32 1.0, %v758
        %v760 = vrcp.pop %v736
        %v761 = vmul.f32 1.0, %v760
        %v762 = vrcp.pop %v737
        %v763 = vmul.f32 1.0, %v762
        %v764 = vrcp.pop %v738
        %v765 = vmul.f32 1.0, %v764
        %v766 = vrcp.pop %v739
        %v767 = vmul.f32 1.0, %v766
        %v768 = vrcp.pop %v740
        %v769 = vmul.f32 1.0, %v768
        %v770 = vrcp.pop %v741
        %v771 = vmul.f32 1.0, %v770
        %v772 = vrcp.pop %v742
        %v773 = vmul.f32 1.0, %v772
        %v774 = vrcp.pop %v743
        %v775 = vmul.f32 1.0, %v774
        %v776 = vmul.f32 %v456, %v745
        %v777 = vmul.f32 %v459, %v747
        %v778 = vmul.f32 %v464, %v749
        %v779 = vmul.f32 %v467, %v751
        %v780 = vmul.f32 %v472, %v753
        %v781 = vmul.f32 %v475, %v755
        %v782 = vmul.f32 %v480, %v757
        %v783 = vmul.f32 %v483, %v759
        %v784 = vmul.f32 %v488, %v761
        %v785 = vmul.f32 %v491, %v763
        %v786 = vmul.f32 %v496, %v765
        %v787 = vmul.f32 %v499, %v767
        %v788 = vmul.f32 %v504, %v769
        %v789 = vmul.f32 %v507, %v771
        %v790 = vmul.f32 %v512, %v773
        %v791 = vmul.f32 %v515, %v775
        %v792 = vmul.f32 %v776, %v618
        %v793 = vmul.f32 %v777, %v621
        %v794 = vmul.f32 %v778, %v626
        %v795 = vmul.f32 %v779, %v629
        %v796 = vmul.f32 %v780, %v634
        %v797 = vmul.f32 %v781, %v637
        %v798 = vmul.f32 %v782, %v642
        %v799 = vmul.f32 %v783, %v645
        %v800 = vmul.f32 %v784, %v650
        %v801 = vmul.f32 %v785, %v653
        %v802 = vmul.f32 %v786, %v658
        %v803 = vmul.f32 %v787, %v661
        %v804 = vmul.f32 %v788, %v666
        %v805 = vmul.f32 %v789, %v669
        %v806 = vmul.f32 %v790, %v674
        %v807 = vmul.f32 %v791, %v677
        %v808 = vld [vmem:[#allocation2] sm:$0xff]
        %v809 = vld [vmem:[#allocation2 + $0x8] sm:$0xff]
        %v810 = vld [vmem:[#allocation2 + $0x10] sm:$0xff]
        %v811 = vld [vmem:[#allocation2 + $0x18] sm:$0xff]
        %v812 = vld [vmem:[#allocation2 + $0x20] sm:$0xff]
        %v813 = vld [vmem:[#allocation2 + $0x28] sm:$0xff]
        %v814 = vld [vmem:[#allocation2 + $0x30] sm:$0xff]
        %v815 = vld [vmem:[#allocation2 + $0x38] sm:$0xff]
        %v816 = vld [vmem:[#allocation2 + $0x40] sm:$0xff]
        %v817 = vld [vmem:[#allocation2 + $0x48] sm:$0xff]
        %v818 = vld [vmem:[#allocation2 + $0x50] sm:$0xff]
        %v819 = vld [vmem:[#allocation2 + $0x58] sm:$0xff]
        %v820 = vld [vmem:[#allocation2 + $0x60] sm:$0xff]
        %v821 = vld [vmem:[#allocation2 + $0x68] sm:$0xff]
        %v822 = vld [vmem:[#allocation2 + $0x70] sm:$0xff]
        %v823 = vld [vmem:[#allocation2 + $0x78] sm:$0xff]
        %v824 = vpack.c.bf16 %v793, %v792
        %v825 = vpack.c.bf16 %v795, %v794
        %v826 = vpack.c.bf16 %v797, %v796
        %v827 = vpack.c.bf16 %v799, %v798
        %v828 = vpack.c.bf16 %v801, %v800
        %v829 = vpack.c.bf16 %v803, %v802
        %v830 = vpack.c.bf16 %v805, %v804
        %v831 = vpack.c.bf16 %v807, %v806
        %v832 = vld [vmem:[%s264] sm:$0xf]
        %v833 = vld [vmem:[%s264 + $0x4] sm:$0xf]
        %v834 = vld [vmem:[%s264 + $0x8] sm:$0xf]
        %v835 = vld [vmem:[%s264 + $0xc] sm:$0xf]
        %v836 = vld [vmem:[%s264 + $0x10] sm:$0xf]
        %v837 = vld [vmem:[%s264 + $0x14] sm:$0xf]
        %v838 = vld [vmem:[%s264 + $0x18] sm:$0xf]
        %v839 = vld [vmem:[%s264 + $0x1c] sm:$0xf]
        %v840 = vld [vmem:[%s264 + $0x20] sm:$0xf]
        %v841 = vld [vmem:[%s264 + $0x24] sm:$0xf]
        %v842 = vld [vmem:[%s264 + $0x28] sm:$0xf]
        %v843 = vld [vmem:[%s264 + $0x2c] sm:$0xf]
        %v844 = vld [vmem:[%s264 + $0x30] sm:$0xf]
        %v845 = vld [vmem:[%s264 + $0x34] sm:$0xf]
        %v846 = vld [vmem:[%s264 + $0x38] sm:$0xf]
        %v847 = vld [vmem:[%s264 + $0x3c] sm:$0xf]
        %v864 = vunpack.c.l.b16 %v832
        %v865 = vunpack.c.l.b16 %v833
        %v866 = vunpack.c.l.b16 %v834
        %v867 = vunpack.c.l.b16 %v835
        %v868 = vunpack.c.l.b16 %v836
        %v869 = vunpack.c.l.b16 %v837
        %v870 = vunpack.c.l.b16 %v838
        %v871 = vunpack.c.l.b16 %v839
        %v872 = vunpack.c.l.b16 %v840
        %v873 = vunpack.c.l.b16 %v841
        %v874 = vunpack.c.l.b16 %v842
        %v875 = vunpack.c.l.b16 %v843
        %v876 = vunpack.c.l.b16 %v844
        %v877 = vunpack.c.l.b16 %v845
        %v878 = vunpack.c.l.b16 %v846
        %v879 = vunpack.c.l.b16 %v847
        %v880 = vpack.c.b16 %v865, %v864
        %v881 = vpack.c.b16 %v867, %v866
        %v882 = vpack.c.b16 %v869, %v868
        %v883 = vpack.c.b16 %v871, %v870
        %v884 = vpack.c.b16 %v873, %v872
        %v885 = vpack.c.b16 %v875, %v874
        %v886 = vpack.c.b16 %v877, %v876
        %v887 = vpack.c.b16 %v879, %v878
        %896 = vmatprep.subr.bf16.mxu0 0
        %897 = vmatpush1.bf16.msra.mxu0 %v880
        %898 = vmatprep.subr.bf16.mxu0 0
        %899 = vmatpush1.bf16.msra.mxu0 %v881
        %900 = vmatprep.subr.bf16.mxu0 0
        %901 = vmatpush1.bf16.msra.mxu0 %v882
        %902 = vmatprep.subr.bf16.mxu0 0
        %903 = vmatpush1.bf16.msra.mxu0 %v883
        %904 = vmatprep.subr.bf16.mxu0 0
        %905 = vmatpush1.bf16.msra.mxu0 %v884
        %906 = vmatprep.subr.bf16.mxu0 0
        %907 = vmatpush1.bf16.msra.mxu0 %v885
        %908 = vmatprep.subr.bf16.mxu0 0
        %909 = vmatpush1.bf16.msra.mxu0 %v886
        %910 = vmatprep.subr.bf16.mxu0 0
        %911 = vmatpush1.bf16.msra.mxu0 %v887
        %912 = vmatprep.subr.bf16.mxu0 0
        %913 = vmatpush1.bf16.msra.mxu0 0
        %914 = vmatprep.subr.bf16.mxu0 0
        %915 = vmatpush1.bf16.msra.mxu0 0
        %916 = vmatprep.subr.bf16.mxu0 0
        %917 = vmatpush1.bf16.msra.mxu0 0
        %918 = vmatprep.subr.bf16.mxu0 0
        %919 = vmatpush1.bf16.msra.mxu0 0
        %920 = vmatprep.subr.bf16.mxu0 0
        %921 = vmatpush1.bf16.msra.mxu0 0
        %922 = vmatprep.subr.bf16.mxu0 0
        %923 = vmatpush1.bf16.msra.mxu0 0
        %924 = vmatprep.subr.bf16.mxu0 0
        %925 = vmatpush1.bf16.msra.mxu0 0
        %926 = vmatprep.subr.bf16.mxu0 0
        %927 = vmatpush1.bf16.msra.mxu0 0
        %928 = vmatprep.mubr.bf16.mxu0 0
        %929 = vmatmul.mubr.bf16.gmra.mrb[0].mxu0 %v824
        %v930 = vpop.f32.mrb[0].mxu0
        %v931 = vadd.f32 0.0, %v930
        %v932 = vpop.f32.mrb[0].mxu0
        %v933 = vpop.f32.mrb[0].mxu0
        %v934 = vadd.f32 0.0, %v933
        %v935 = vpop.f32.mrb[0].mxu0
        %936 = vmatprep.mubr.bf16.mxu0 0
        %937 = vmatmul.mubr.bf16.gmra.mrb[0].mxu0 %v825
        %v938 = vpop.f32.mrb[0].mxu0
        %v939 = vadd.f32 0.0, %v938
        %v940 = vpop.f32.mrb[0].mxu0
        %v941 = vpop.f32.mrb[0].mxu0
        %v942 = vadd.f32 0.0, %v941
        %v943 = vpop.f32.mrb[0].mxu0
        %944 = vmatprep.mubr.bf16.mxu0 0
        %945 = vmatmul.mubr.bf16.gmra.mrb[0].mxu0 %v826
        %v946 = vpop.f32.mrb[0].mxu0
        %v947 = vadd.f32 0.0, %v946
        %v948 = vpop.f32.mrb[0].mxu0
        %v949 = vpop.f32.mrb[0].mxu0
        %v950 = vadd.f32 0.0, %v949
        %v951 = vpop.f32.mrb[0].mxu0
        %952 = vmatprep.mubr.bf16.mxu0 0
        %953 = vmatmul.mubr.bf16.gmra.mrb[0].mxu0 %v827
        %v954 = vpop.f32.mrb[0].mxu0
        %v955 = vadd.f32 0.0, %v954
        %v956 = vpop.f32.mrb[0].mxu0
        %v957 = vpop.f32.mrb[0].mxu0
        %v958 = vadd.f32 0.0, %v957
        %v959 = vpop.f32.mrb[0].mxu0
        %960 = vmatprep.mubr.bf16.mxu0 0
        %961 = vmatmul.mubr.bf16.gmra.mrb[0].mxu0 %v828
        %v962 = vpop.f32.mrb[0].mxu0
        %v963 = vadd.f32 0.0, %v962
        %v964 = vpop.f32.mrb[0].mxu0
        %v965 = vpop.f32.mrb[0].mxu0
        %v966 = vadd.f32 0.0, %v965
        %v967 = vpop.f32.mrb[0].mxu0
        %968 = vmatprep.mubr.bf16.mxu0 0
        %969 = vmatmul.mubr.bf16.gmra.mrb[0].mxu0 %v829
        %v970 = vpop.f32.mrb[0].mxu0
        %v971 = vadd.f32 0.0, %v970
        %v972 = vpop.f32.mrb[0].mxu0
        %v973 = vpop.f32.mrb[0].mxu0
        %v974 = vadd.f32 0.0, %v973
        %v975 = vpop.f32.mrb[0].mxu0
        %976 = vmatprep.mubr.bf16.mxu0 0
        %977 = vmatmul.mubr.bf16.gmra.mrb[0].mxu0 %v830
        %v978 = vpop.f32.mrb[0].mxu0
        %v979 = vadd.f32 0.0, %v978
        %v980 = vpop.f32.mrb[0].mxu0
        %v981 = vpop.f32.mrb[0].mxu0
        %v982 = vadd.f32 0.0, %v981
        %v983 = vpop.f32.mrb[0].mxu0
        %984 = vmatprep.mubr.bf16.mxu0 0
        %985 = vmatmul.mubr.bf16.gmra.mrb[0].mxu0 %v831
        %v986 = vpop.f32.mrb[0].mxu0
        %v987 = vadd.f32 0.0, %v986
        %v988 = vpop.f32.mrb[0].mxu0
        %v989 = vpop.f32.mrb[0].mxu0
        %v990 = vadd.f32 0.0, %v989
        %v991 = vpop.f32.mrb[0].mxu0
        %992 = vdwg.mxu0
        %v993 = vadd.f32 %v808, %v931
        %v994 = vadd.f32 %v809, %v934
        %v995 = vadd.f32 %v810, %v939
        %v996 = vadd.f32 %v811, %v942
        %v997 = vadd.f32 %v812, %v947
        %v998 = vadd.f32 %v813, %v950
        %v999 = vadd.f32 %v814, %v955
        %v1000 = vadd.f32 %v815, %v958
        %v1001 = vadd.f32 %v816, %v963
        %v1002 = vadd.f32 %v817, %v966
        %v1003 = vadd.f32 %v818, %v971
        %v1004 = vadd.f32 %v819, %v974
        %v1005 = vadd.f32 %v820, %v979
        %v1006 = vadd.f32 %v821, %v982
        %v1007 = vadd.f32 %v822, %v987
        %v1008 = vadd.f32 %v823, %v990
        %1009 = vst [vmem:[#allocation2] sm:$0xff] %v993
        %1010 = vst [vmem:[#allocation2 + $0x8] sm:$0xff] %v994
        %1011 = vst [vmem:[#allocation2 + $0x10] sm:$0xff] %v995
        %1012 = vst [vmem:[#allocation2 + $0x18] sm:$0xff] %v996
        %1013 = vst [vmem:[#allocation2 + $0x20] sm:$0xff] %v997
        %1014 = vst [vmem:[#allocation2 + $0x28] sm:$0xff] %v998
        %1015 = vst [vmem:[#allocation2 + $0x30] sm:$0xff] %v999
        %1016 = vst [vmem:[#allocation2 + $0x38] sm:$0xff] %v1000
        %1017 = vst [vmem:[#allocation2 + $0x40] sm:$0xff] %v1001
        %1018 = vst [vmem:[#allocation2 + $0x48] sm:$0xff] %v1002
        %1019 = vst [vmem:[#allocation2 + $0x50] sm:$0xff] %v1003
        %1020 = vst [vmem:[#allocation2 + $0x58] sm:$0xff] %v1004
        %1021 = vst [vmem:[#allocation2 + $0x60] sm:$0xff] %v1005
        %1022 = vst [vmem:[#allocation2 + $0x68] sm:$0xff] %v1006
        %1023 = vst [vmem:[#allocation2 + $0x70] sm:$0xff] %v1007
        %1024 = vst [vmem:[#allocation2 + $0x78] sm:$0xff] %v1008
        %p1025 = scmp.eq.s32.totalorder %s23, 1
        // Predicated region
        $region45: #{ss_mixtral_block_sparse_top2_mlp.1} parent=35 // pred_check
          %p1026 = pneg %p1025
        $region46: #{ss_mixtral_block_sparse_top2_mlp.1} parent=35 // pred_check_branch
          %1028 = sbr.rel (%p1026) target = $region48
        $region47: #{ss_mixtral_block_sparse_top2_mlp.1} parent=35 // pred_region
          %v1029 = vld [vmem:[#allocation2] sm:$0xff]
          %v1030 = vld [vmem:[#allocation2 + $0x8] sm:$0xff]
          %v1031 = vld [vmem:[#allocation2 + $0x10] sm:$0xff]
          %v1032 = vld [vmem:[#allocation2 + $0x18] sm:$0xff]
          %v1033 = vld [vmem:[#allocation2 + $0x20] sm:$0xff]
          %v1034 = vld [vmem:[#allocation2 + $0x28] sm:$0xff]
          %v1035 = vld [vmem:[#allocation2 + $0x30] sm:$0xff]
          %v1036 = vld [vmem:[#allocation2 + $0x38] sm:$0xff]
          %v1037 = vld [vmem:[#allocation2 + $0x40] sm:$0xff]
          %v1038 = vld [vmem:[#allocation2 + $0x48] sm:$0xff]
          %v1039 = vld [vmem:[#allocation2 + $0x50] sm:$0xff]
          %v1040 = vld [vmem:[#allocation2 + $0x58] sm:$0xff]
          %v1041 = vld [vmem:[#allocation2 + $0x60] sm:$0xff]
          %v1042 = vld [vmem:[#allocation2 + $0x68] sm:$0xff]
          %v1043 = vld [vmem:[#allocation2 + $0x70] sm:$0xff]
          %v1044 = vld [vmem:[#allocation2 + $0x78] sm:$0xff]
          %v1045 = vld [vmem:[%s3] sm:$0xff]
          %v1046 = vld [vmem:[%s3 + $0x8] sm:$0xff]
          %v1047 = vld [vmem:[%s3 + $0x10] sm:$0xff]
          %v1048 = vld [vmem:[%s3 + $0x18] sm:$0xff]
          %v1049 = vld [vmem:[%s3 + $0x20] sm:$0xff]
          %v1050 = vld [vmem:[%s3 + $0x28] sm:$0xff]
          %v1051 = vld [vmem:[%s3 + $0x30] sm:$0xff]
          %v1052 = vld [vmem:[%s3 + $0x38] sm:$0xff]
          %v1053 = vld [vmem:[%s3 + $0x40] sm:$0xff]
          %v1054 = vld [vmem:[%s3 + $0x48] sm:$0xff]
          %v1055 = vld [vmem:[%s3 + $0x50] sm:$0xff]
          %v1056 = vld [vmem:[%s3 + $0x58] sm:$0xff]
          %v1057 = vld [vmem:[%s3 + $0x60] sm:$0xff]
          %v1058 = vld [vmem:[%s3 + $0x68] sm:$0xff]
          %v1059 = vld [vmem:[%s3 + $0x70] sm:$0xff]
          %v1060 = vld [vmem:[%s3 + $0x78] sm:$0xff]
          %1062 = vset.pattern.permute.xlu0 0
          %1063 = vperm.xlu0 %1062, %v1045
          %v1064 = vpop.permute.xlu0 %1063
          %1067 = vset.pattern.permute.xlu0 0
          %1068 = vperm.xlu0 %1067, %v1046
          %v1069 = vpop.permute.xlu0 %1068
          %1072 = vset.pattern.permute.xlu0 0
          %1073 = vperm.xlu0 %1072, %v1047
          %v1074 = vpop.permute.xlu0 %1073
          %1077 = vset.pattern.permute.xlu0 0
          %1078 = vperm.xlu0 %1077, %v1048
          %v1079 = vpop.permute.xlu0 %1078
          %1082 = vset.pattern.permute.xlu0 0
          %1083 = vperm.xlu0 %1082, %v1049
          %v1084 = vpop.permute.xlu0 %1083
          %1087 = vset.pattern.permute.xlu0 0
          %1088 = vperm.xlu0 %1087, %v1050
          %v1089 = vpop.permute.xlu0 %1088
          %1092 = vset.pattern.permute.xlu0 0
          %1093 = vperm.xlu0 %1092, %v1051
          %v1094 = vpop.permute.xlu0 %1093
          %1097 = vset.pattern.permute.xlu0 0
          %1098 = vperm.xlu0 %1097, %v1052
          %v1099 = vpop.permute.xlu0 %1098
          %1102 = vset.pattern.permute.xlu0 0
          %1103 = vperm.xlu0 %1102, %v1053
          %v1104 = vpop.permute.xlu0 %1103
          %1107 = vset.pattern.permute.xlu0 0
          %1108 = vperm.xlu0 %1107, %v1054
          %v1109 = vpop.permute.xlu0 %1108
          %1112 = vset.pattern.permute.xlu0 0
          %1113 = vperm.xlu0 %1112, %v1055
          %v1114 = vpop.permute.xlu0 %1113
          %1117 = vset.pattern.permute.xlu0 0
          %1118 = vperm.xlu0 %1117, %v1056
          %v1119 = vpop.permute.xlu0 %1118
          %1122 = vset.pattern.permute.xlu0 0
          %1123 = vperm.xlu0 %1122, %v1057
          %v1124 = vpop.permute.xlu0 %1123
          %1127 = vset.pattern.permute.xlu0 0
          %1128 = vperm.xlu0 %1127, %v1058
          %v1129 = vpop.permute.xlu0 %1128
          %1132 = vset.pattern.permute.xlu0 0
          %1133 = vperm.xlu0 %1132, %v1059
          %v1134 = vpop.permute.xlu0 %1133
          %1137 = vset.pattern.permute.xlu0 0
          %1138 = vperm.xlu0 %1137, %v1060
          %v1139 = vpop.permute.xlu0 %1138
          %v1141 = vmul.f32 %v1029, %v1064
          %v1142 = vmul.f32 %v1030, %v1069
          %v1143 = vmul.f32 %v1031, %v1074
          %v1144 = vmul.f32 %v1032, %v1079
          %v1145 = vmul.f32 %v1033, %v1084
          %v1146 = vmul.f32 %v1034, %v1089
          %v1147 = vmul.f32 %v1035, %v1094
          %v1148 = vmul.f32 %v1036, %v1099
          %v1149 = vmul.f32 %v1037, %v1104
          %v1150 = vmul.f32 %v1038, %v1109
          %v1151 = vmul.f32 %v1039, %v1114
          %v1152 = vmul.f32 %v1040, %v1119
          %v1153 = vmul.f32 %v1041, %v1124
          %v1154 = vmul.f32 %v1042, %v1129
          %v1155 = vmul.f32 %v1043, %v1134
          %v1156 = vmul.f32 %v1044, %v1139
          %1157 = vst [vmem:[%s271] sm:$0xff] %v1141
          %1158 = vst [vmem:[%s271 + $0x8] sm:$0xff] %v1142
          %1159 = vst [vmem:[%s271 + $0x10] sm:$0xff] %v1143
          %1160 = vst [vmem:[%s271 + $0x18] sm:$0xff] %v1144
          %1161 = vst [vmem:[%s271 + $0x20] sm:$0xff] %v1145
          %1162 = vst [vmem:[%s271 + $0x28] sm:$0xff] %v1146
          %1163 = vst [vmem:[%s271 + $0x30] sm:$0xff] %v1147
          %1164 = vst [vmem:[%s271 + $0x38] sm:$0xff] %v1148
          %1165 = vst [vmem:[%s271 + $0x40] sm:$0xff] %v1149
          %1166 = vst [vmem:[%s271 + $0x48] sm:$0xff] %v1150
          %1167 = vst [vmem:[%s271 + $0x50] sm:$0xff] %v1151
          %1168 = vst [vmem:[%s271 + $0x58] sm:$0xff] %v1152
          %1169 = vst [vmem:[%s271 + $0x60] sm:$0xff] %v1153
          %1170 = vst [vmem:[%s271 + $0x68] sm:$0xff] %v1154
          %1171 = vst [vmem:[%s271 + $0x70] sm:$0xff] %v1155
          %1172 = vst [vmem:[%s271 + $0x78] sm:$0xff] %v1156
        $region48: #{ss_mixtral_block_sparse_top2_mlp.1} parent=35 // pred_fallthru
          _
        %p1173 = scmp.lt.s32.totalorder %s22, 1
        %s1174 = scalar_select %p1173, %s22, 1
        %s1175 = smul.addr %s1174, 16
        %s1176 = smul.addr %s1175, 8
        %s1177 = scalar_lea.vmem %s4, %s1176
        // Predicated region
        $region49: #{ss_mixtral_block_sparse_top2_mlp.1} parent=35 // pred_check
          %p1178 = pneg %p150
        $region50: #{ss_mixtral_block_sparse_top2_mlp.1} parent=35 // pred_check_branch
          %1180 = sbr.rel (%p1178) target = $region52
        $region51: #{ss_mixtral_block_sparse_top2_mlp.1} parent=35 // pred_region
          _
        $region52: #{ss_mixtral_block_sparse_top2_mlp.1} parent=35 // pred_fallthru
          _
      $region36: #{ss_mixtral_block_sparse_top2_mlp.1} parent=5 // pred_fallthru
        _
      %p1181 = scmp.le.s32.totalorder 2, %s13
      // Predicated region
      $region53: #{ss_mixtral_block_sparse_top2_mlp.1} parent=5 // pred_check
        %p1182 = pneg %p1181
      $region54: #{ss_mixtral_block_sparse_top2_mlp.1} parent=5 // pred_check_branch
        %1184 = sbr.rel (%p1182) target = $region56
      $region55: #{ss_mixtral_block_sparse_top2_mlp.1} parent=5 // pred_region
        %s1185 = ssub.s32 %s13, 2
        // Predicated region
        $region57: #{ss_mixtral_block_sparse_top2_mlp.1} parent=55 // pred_check
          %p1186 = pneg %p156
        $region58: #{ss_mixtral_block_sparse_top2_mlp.1} parent=55 // pred_check_branch
          %1188 = sbr.rel (%p1186) target = $region60
        $region59: #{ss_mixtral_block_sparse_top2_mlp.1} parent=55 // pred_region
          %p1189 = scmp.lt.s32.totalorder %s24, 1
          %s1190 = scalar_select %p1189, %s24, 1
          %s1191 = smul.addr %s1190, 16
          %s1192 = smul.addr %s1191, 8
          %s1193 = scalar_lea.vmem %s4, %s1192
        $region60: #{ss_mixtral_block_sparse_top2_mlp.1} parent=55 // pred_fallthru
          _
      $region56: #{ss_mixtral_block_sparse_top2_mlp.1} parent=5 // pred_fallthru
        _
    $region6: #{ss_mixtral_block_sparse_top2_mlp.1} parent=1 // loop_footer
      %s17 = sadd.s32 1, %s13
    $region7: #{ss_mixtral_block_sparse_top2_mlp.1} parent=1 // loop_footer_branch
      %12 = sbr.rel target = $region3
    $region8: #{ss_mixtral_block_sparse_top2_mlp.1} parent=1 // loop_exit
      _
    %1194 = vsyncpa [#allocation4], 1
    %s1195 = scalar_lea.sflag [#allocation4], 1
    %1196 = vsyncpa %s1195, 1

</llo_original>
